<compile_context>
chip_gen: v7x
topology: tpu7x:2x2x1
jax: 0.10.0
libtpu: 0.0.40
codegen_flags: <defaults>
</compile_context>

<pallas_src>
import jax
import jax.numpy as jnp
from jax.experimental import pallas as pl
from jax.experimental.pallas import tpu as pltpu


_HIDDEN = 128


def _mlp_kernel(x_ref, w1_ref, b1_ref, w2_ref, b2_ref, w3_ref, b3_ref, o_ref):
    # fc1: (TB, K) @ (K, 128) on the MXU, bf16 operands, f32 accumulation.
    x = x_ref[...].astype(jnp.bfloat16)
    h = jnp.dot(x, w1_ref[...], preferred_element_type=jnp.float32) + b1_ref[...]
    h = jnp.where(h > 0, h, 0.01 * h)            # LeakyReLU(0.01) in f32 (VPU)

    # fc2: (TB, 128) @ (128, 128)
    h = jnp.dot(h.astype(jnp.bfloat16), w2_ref[...],
                preferred_element_type=jnp.float32) + b2_ref[...]
    h = jnp.where(h > 0, h, 0.01 * h)

    # fc3 (128 -> 1): VPU multiply + lane reduction instead of an N=1 MXU
    # matmul; emit a lane-dense (TB//128, 128) tile so stores are unmasked.
    prod = h * w3_ref[...]                        # (TB, 128) * (1, 128)
    tb = prod.shape[0]
    out = jnp.sum(prod.reshape(tb // 128, 128, 128), axis=-1) + b3_ref[0, 0]
    o_ref[...] = out.astype(o_ref.dtype)


def _round_up(n, m):
    return (n + m - 1) // m * m


def mlp_forward(x, params, block_rows=1024):
    """x: (B, input_size) f32 -> (B, 1) f32, matching NeuralNetwork.forward."""
    w1, b1, w2, b2, w3, b3 = params
    B, K = x.shape
    assert block_rows % 1024 == 0, "tile must keep rows/128 a multiple of 8"

    # Pad the batch to a lane-friendly size; `tb` rows are processed per step.
    bp = _round_up(max(B, 1), 128)
    if bp > block_rows:
        tb = block_rows              # multi-tile path: tb//128 is a multiple of 8
        bp = _round_up(bp, tb)
    else:
        tb = bp                      # single tile covers the whole (padded) batch
    if bp != B:
        x = jnp.pad(x, ((0, bp - B), (0, 0)))

    num_tiles = bp // tb
    g = tb // 128                    # lane-dense output rows produced per step

    out2d = pl.pallas_call(
        _mlp_kernel,
        out_shape=jax.ShapeDtypeStruct((bp // 128, 128), jnp.float32),
        grid=(num_tiles,),
        in_specs=[
            pl.BlockSpec((tb, K), lambda i: (i, 0)),             # x tile (pipelined)
            pl.BlockSpec((K, _HIDDEN), lambda i: (0, 0)),        # w1 (resident)
            pl.BlockSpec((1, _HIDDEN), lambda i: (0, 0)),        # b1 (resident)
            pl.BlockSpec((_HIDDEN, _HIDDEN), lambda i: (0, 0)),  # w2 (resident)
            pl.BlockSpec((1, _HIDDEN), lambda i: (0, 0)),        # b2 (resident)
            pl.BlockSpec((1, _HIDDEN), lambda i: (0, 0)),        # w3 row (resident)
            pl.BlockSpec(memory_space=pltpu.MemorySpace.SMEM),   # b3 scalar
        ],
        out_specs=pl.BlockSpec((g, 128), lambda i: (i, 0)),      # lane-dense slab
        compiler_params=pltpu.CompilerParams(
            dimension_semantics=("parallel",)),
    )(x, w1, b1, w2, b2, w3, b3)

    # Lane-dense (bp//128, 128) slab back to (B, 1) rows (padded tail dropped).
    return out2d.reshape(-1)[:B].reshape(B, 1)


def init_params(key, input_size, hidden=_HIDDEN):
    """Deterministic synthetic parameters (shapes follow nn.Linear).

    Weights are stored transposed vs. torch ((in, out)); the MXU weights
    w1/w2 are kept in bfloat16, biases and the fc3 row stay in f32.
    """
    k = jax.random.split(key, 6)
    w1 = (jax.random.normal(k[0], (input_size, hidden), jnp.float32) * 0.05
          ).astype(jnp.bfloat16)
    b1 = jax.random.normal(k[1], (1, hidden), jnp.float32) * 0.05
    w2 = (jax.random.normal(k[2], (hidden, hidden), jnp.float32) * 0.05
          ).astype(jnp.bfloat16)
    b2 = jax.random.normal(k[3], (1, hidden), jnp.float32) * 0.05
    w3 = jax.random.normal(k[4], (1, hidden), jnp.float32) * 0.05   # fc3 weight row
    b3 = jax.random.normal(k[5], (1, 1), jnp.float32) * 0.05
    return (w1, b1, w2, b2, w3, b3)


def _reference(x, params):
    """Pure-JAX reference with the same dtype strategy as the kernel."""
    w1, b1, w2, b2, w3, b3 = params
    lrelu = lambda v: jnp.where(v > 0, v, 0.01 * v)
    h = lrelu(jnp.dot(x.astype(jnp.bfloat16), w1,
                      preferred_element_type=jnp.float32) + b1)
    h = lrelu(jnp.dot(h.astype(jnp.bfloat16), w2,
                      preferred_element_type=jnp.float32) + b2)
    return jnp.sum(h * w3, axis=-1, keepdims=True) + b3[0, 0]


if __name__ == "__main__":
    key = jax.random.PRNGKey(0)
    batch, input_size = 8, 32

    kx, kp = jax.random.split(key)
    x = jax.random.normal(kx, (batch, input_size), jnp.float32)
    params = init_params(kp, input_size)

    out = jax.block_until_ready(mlp_forward(x, params))
    ref = _reference(x, params)
    assert out.shape == (batch, 1), out.shape
    assert jnp.allclose(out, ref, atol=1e-3, rtol=1e-3), \
        float(jnp.max(jnp.abs(out - ref)))

    # Also exercise the multi-tile (pipelined) grid path plus the padded tail.
    x2 = jax.random.normal(jax.random.PRNGKey(1), (2176, input_size), jnp.float32)
    out2 = jax.block_until_ready(mlp_forward(x2, params))
    ref2 = _reference(x2, params)
    assert out2.shape == (2176, 1), out2.shape
    assert jnp.allclose(out2, ref2, atol=1e-3, rtol=1e-3), \
        float(jnp.max(jnp.abs(out2 - ref2)))

    print("KERNEL_OK")
</pallas_src>

<mosaic_0001>
module attributes {stable_mosaic.version = 11 : i64} {
  func.func @_mlp_kernel(%arg0: i32, %arg1: memref<128x32xf32, #tpu.memory_space<vmem>>, %arg2: memref<32x128xbf16, #tpu.memory_space<vmem>>, %arg3: memref<1x128xf32, #tpu.memory_space<vmem>>, %arg4: memref<128x128xbf16, #tpu.memory_space<vmem>>, %arg5: memref<1x128xf32, #tpu.memory_space<vmem>>, %arg6: memref<1x128xf32, #tpu.memory_space<vmem>>, %arg7: memref<1x1xf32, #tpu.memory_space<smem>>, %arg8: memref<1x128xf32, #tpu.memory_space<vmem>>) attributes {dimension_semantics = [#tpu.dimension_semantics<parallel>], iteration_bounds = array<i64: 1>, scalar_prefetch = 0 : i64, scratch_operands = 0 : i64, tpu.core_type = #tpu.core_type<tc>, window_params = [{transform_indices = @transform_0, window_bounds = array<i64: 128, 32>}, {pipeline_mode = #tpu.pipeline_mode<synchronous>, transform_indices = @transform_1, window_bounds = array<i64: 32, 128>}, {pipeline_mode = #tpu.pipeline_mode<synchronous>, transform_indices = @transform_2, window_bounds = array<i64: 1, 128>}, {pipeline_mode = #tpu.pipeline_mode<synchronous>, transform_indices = @transform_3, window_bounds = array<i64: 128, 128>}, {pipeline_mode = #tpu.pipeline_mode<synchronous>, transform_indices = @transform_4, window_bounds = array<i64: 1, 128>}, {pipeline_mode = #tpu.pipeline_mode<synchronous>, transform_indices = @transform_5, window_bounds = array<i64: 1, 128>}, {transform_indices = @transform_6, window_bounds = array<i64: 1, 1>}, {transform_indices = @transform_7, window_bounds = array<i64: 1, 128>}]} {
    %c0 = arith.constant 0 : index
    %c0_0 = arith.constant 0 : index
    %0 = vector.load %arg1[%c0, %c0_0] : memref<128x32xf32, #tpu.memory_space<vmem>>, vector<128x32xf32>
    %1 = arith.truncf %0 : vector<128x32xf32> to vector<128x32xbf16>
    %c0_1 = arith.constant 0 : index
    %c0_2 = arith.constant 0 : index
    %2 = vector.load %arg2[%c0_1, %c0_2] : memref<32x128xbf16, #tpu.memory_space<vmem>>, vector<32x128xbf16>
    %cst = arith.constant dense<0.000000e+00> : vector<128x128xf32>
    %3 = tpu.matmul %1, %2, %cst {dimension_numbers = #tpu.dot_dimension_numbers<[1], [0], [0], [1], [0, 0, 1, 1], [], []>} : vector<128x32xbf16>, vector<32x128xbf16>, vector<128x128xf32> -> vector<128x128xf32>
    %c0_3 = arith.constant 0 : index
    %c0_4 = arith.constant 0 : index
    %4 = vector.load %arg3[%c0_3, %c0_4] : memref<1x128xf32, #tpu.memory_space<vmem>>, vector<1x128xf32>
    %5 = vector.broadcast %4 : vector<1x128xf32> to vector<128x128xf32>
    %6 = arith.addf %3, %5 : vector<128x128xf32>
    %cst_5 = arith.constant 0.000000e+00 : f32
    %7 = vector.broadcast %cst_5 : f32 to vector<128x128xf32>
    %8 = arith.cmpf ogt, %6, %7 : vector<128x128xf32>
    %cst_6 = arith.constant 0.00999999977 : f32
    %9 = vector.broadcast %cst_6 : f32 to vector<128x128xf32>
    %10 = arith.mulf %9, %6 : vector<128x128xf32>
    %11 = arith.select %8, %6, %10 : vector<128x128xi1>, vector<128x128xf32>
    %12 = arith.truncf %11 : vector<128x128xf32> to vector<128x128xbf16>
    %c0_7 = arith.constant 0 : index
    %c0_8 = arith.constant 0 : index
    %13 = vector.load %arg4[%c0_7, %c0_8] : memref<128x128xbf16, #tpu.memory_space<vmem>>, vector<128x128xbf16>
    %cst_9 = arith.constant dense<0.000000e+00> : vector<128x128xf32>
    %14 = tpu.matmul %12, %13, %cst_9 {dimension_numbers = #tpu.dot_dimension_numbers<[1], [0], [0], [1], [0, 0, 1, 1], [], []>} : vector<128x128xbf16>, vector<128x128xbf16>, vector<128x128xf32> -> vector<128x128xf32>
    %c0_10 = arith.constant 0 : index
    %c0_11 = arith.constant 0 : index
    %15 = vector.load %arg5[%c0_10, %c0_11] : memref<1x128xf32, #tpu.memory_space<vmem>>, vector<1x128xf32>
    %16 = vector.broadcast %15 : vector<1x128xf32> to vector<128x128xf32>
    %17 = arith.addf %14, %16 : vector<128x128xf32>
    %cst_12 = arith.constant 0.000000e+00 : f32
    %18 = vector.broadcast %cst_12 : f32 to vector<128x128xf32>
    %19 = arith.cmpf ogt, %17, %18 : vector<128x128xf32>
    %cst_13 = arith.constant 0.00999999977 : f32
    %20 = vector.broadcast %cst_13 : f32 to vector<128x128xf32>
    %21 = arith.mulf %20, %17 : vector<128x128xf32>
    %22 = arith.select %19, %17, %21 : vector<128x128xi1>, vector<128x128xf32>
    %c0_14 = arith.constant 0 : index
    %c0_15 = arith.constant 0 : index
    %23 = vector.load %arg6[%c0_14, %c0_15] : memref<1x128xf32, #tpu.memory_space<vmem>>, vector<1x128xf32>
    %24 = vector.broadcast %23 : vector<1x128xf32> to vector<128x128xf32>
    %25 = arith.mulf %22, %24 : vector<128x128xf32>
    %26 = vector.shape_cast %25 : vector<128x128xf32> to vector<1x128x128xf32>
    %cst_16 = arith.constant dense<0.000000e+00> : vector<1x128xf32>
    %27 = vector.multi_reduction <add>, %26, %cst_16 [2] : vector<1x128x128xf32> to vector<1x128xf32>
    %c0_17 = arith.constant 0 : index
    %c0_18 = arith.constant 0 : index
    %28 = memref.load %arg7[%c0_17, %c0_18] : memref<1x1xf32, #tpu.memory_space<smem>>
    %29 = vector.broadcast %28 : f32 to vector<1x128xf32>
    %30 = arith.addf %27, %29 : vector<1x128xf32>
    %c0_19 = arith.constant 0 : index
    %c0_20 = arith.constant 0 : index
    %31 = vector.load %arg8[%c0_19, %c0_20] : memref<1x128xf32, #tpu.memory_space<vmem>>, vector<1x128xf32>
    tpu.vector_store %arg8[%c0_19, %c0_20], %30 {strides = array<i32>} : memref<1x128xf32, #tpu.memory_space<vmem>>, vector<1x128xf32>,
    return
  }
  func.func @transform_0(%arg0: i32) -> (i32, i32) {
    %c0_i32 = arith.constant 0 : i32
    %c0_i32_0 = arith.constant 0 : i32
    return %arg0, %c0_i32 : i32, i32
  }
  func.func @transform_1(%arg0: i32) -> (i32, i32) {
    %c0_i32 = arith.constant 0 : i32
    %c0_i32_0 = arith.constant 0 : i32
    %c0_i32_1 = arith.constant 0 : i32
    return %c0_i32, %c0_i32_0 : i32, i32
  }
  func.func @transform_2(%arg0: i32) -> (i32, i32) {
    %c0_i32 = arith.constant 0 : i32
    %c0_i32_0 = arith.constant 0 : i32
    %c0_i32_1 = arith.constant 0 : i32
    return %c0_i32, %c0_i32_0 : i32, i32
  }
  func.func @transform_3(%arg0: i32) -> (i32, i32) {
    %c0_i32 = arith.constant 0 : i32
    %c0_i32_0 = arith.constant 0 : i32
    %c0_i32_1 = arith.constant 0 : i32
    return %c0_i32, %c0_i32_0 : i32, i32
  }
  func.func @transform_4(%arg0: i32) -> (i32, i32) {
    %c0_i32 = arith.constant 0 : i32
    %c0_i32_0 = arith.constant 0 : i32
    %c0_i32_1 = arith.constant 0 : i32
    return %c0_i32, %c0_i32_0 : i32, i32
  }
  func.func @transform_5(%arg0: i32) -> (i32, i32) {
    %c0_i32 = arith.constant 0 : i32
    %c0_i32_0 = arith.constant 0 : i32
    %c0_i32_1 = arith.constant 0 : i32
    return %c0_i32, %c0_i32_0 : i32, i32
  }
  func.func @transform_6(%arg0: i32) -> (i32, i32) {
    %c0_i32 = arith.constant 0 : i32
    %c0_i32_0 = arith.constant 0 : i32
    %c0_i32_1 = arith.constant 0 : i32
    return %c0_i32, %c0_i32_0 : i32, i32
  }
  func.func @transform_7(%arg0: i32) -> (i32, i32) {
    %c0_i32 = arith.constant 0 : i32
    %c0_i32_0 = arith.constant 0 : i32
    return %arg0, %c0_i32 : i32, i32
  }
}

</mosaic_0001>

<llo_original>
// kernel: tpu_custom_call.1
$region0: #{tpu_custom_call.1}
  #allocation0 [shape = 'u32[]', space=smem, size = 0x4, offset = 0x4, fixed_abs, tag = 'smem constant byte address 0x4 - core index']
  #allocation1 [shape = 'u32[144,128]{1,0:T(1,128)}', space=vmem, size = 0x12000, scoped, tag = 'internal scratch']
  #allocation2 [shape = 'f32[1,1]{1,0:T(1,128)S(6)}', space=smem, size = 0x200, scoped, tag = 'scoped memory for tpu_custom_call.1']
  %s0 = inlined_call_operand.vmem [shape: f32[128,32], index: 0, kind: input, shape index: {}]
  %s1 = inlined_call_operand.vmem [shape: bf16[32,128], index: 1, kind: input, shape index: {}]
  %s2 = inlined_call_operand.vmem [shape: f32[1,128], index: 2, kind: input, shape index: {}]
  %s3 = inlined_call_operand.vmem [shape: bf16[128,128], index: 3, kind: input, shape index: {}]
  %s4 = inlined_call_operand.vmem [shape: f32[1,128], index: 4, kind: input, shape index: {}]
  %s5 = inlined_call_operand.vmem [shape: f32[1,128], index: 5, kind: input, shape index: {}]
  %s6 = inlined_call_operand.<no memory space> [shape: f32[1,1], index: 6, kind: input, shape index: {}]
  %s7 = inlined_call_operand.hbm [shape: f32[1,128], index: 7, kind: output, shape index: {}]
  %s8 = sld [smem:[#allocation0]]
  $region38: #{tpu_custom_call.1} parent=0
    _
  %s10 = ssub.s32 1, %s8
  %s11 = scalar_select 0, %s10, %s8
  %12 = sst [smem:[#allocation2]] %s6
  $region1: #{tpu_custom_call.1} parent=0
    #allocation3 [shape = 'u8[512]{0}', space=vmem, size = 0x400, scoped, tag = 'output window, operand 0, single buffered']
    #allocation4 [shape = 's32[1]{0}', space=sflag, size = 0x4, scoped, tag = 'scoped memory for tpu_custom_call.1']
    %13 = vsyncpa [#allocation4], 0
    // Predicated region
    $region2: #{tpu_custom_call.1} parent=1 // pred_check
      _
    $region3: #{tpu_custom_call.1} parent=1 // pred_check_branch
      %15 = sbr.rel (0) target = $region5
    $region4: #{tpu_custom_call.1} parent=1 // pred_region
      _
    $region5: #{tpu_custom_call.1} parent=1 // pred_fallthru
      _
    // Predicated region
    $region6: #{tpu_custom_call.1} parent=1 // pred_check
      _
    $region7: #{tpu_custom_call.1} parent=1 // pred_check_branch
      %17 = sbr.rel (0) target = $region9
    $region8: #{tpu_custom_call.1} parent=1 // pred_region
      _
    $region9: #{tpu_custom_call.1} parent=1 // pred_fallthru
      _
    // Predicated region
    $region10: #{tpu_custom_call.1} parent=1 // pred_check
      _
    $region11: #{tpu_custom_call.1} parent=1 // pred_check_branch
      %19 = sbr.rel (0) target = $region13
    $region12: #{tpu_custom_call.1} parent=1 // pred_region
      _
    $region13: #{tpu_custom_call.1} parent=1 // pred_fallthru
      _
    // Predicated region
    $region14: #{tpu_custom_call.1} parent=1 // pred_check
      _
    $region15: #{tpu_custom_call.1} parent=1 // pred_check_branch
      %21 = sbr.rel (0) target = $region17
    $region16: #{tpu_custom_call.1} parent=1 // pred_region
      _
    $region17: #{tpu_custom_call.1} parent=1 // pred_fallthru
      _
    // Predicated region
    $region18: #{tpu_custom_call.1} parent=1 // pred_check
      _
    $region19: #{tpu_custom_call.1} parent=1 // pred_check_branch
      %23 = sbr.rel (0) target = $region21
    $region20: #{tpu_custom_call.1} parent=1 // pred_region
      _
    $region21: #{tpu_custom_call.1} parent=1 // pred_fallthru
      _
    // Predicated region
    $region22: #{tpu_custom_call.1} parent=1 // pred_check
      _
    $region23: #{tpu_custom_call.1} parent=1 // pred_check_branch
      %25 = sbr.rel (0) target = $region25
    $region24: #{tpu_custom_call.1} parent=1 // pred_region
      _
    $region25: #{tpu_custom_call.1} parent=1 // pred_fallthru
      _
    // Predicated region
    $region26: #{tpu_custom_call.1} parent=1 // pred_check
      _
    $region27: #{tpu_custom_call.1} parent=1 // pred_check_branch
      %27 = sbr.rel (0) target = $region29
    $region28: #{tpu_custom_call.1} parent=1 // pred_region
      _
    $region29: #{tpu_custom_call.1} parent=1 // pred_fallthru
      _
    %v29 = vld [vmem:[%s0] sm:$0xff]
    %v30 = vld [vmem:[%s0 + $0x8] sm:$0xff]
    %v31 = vld [vmem:[%s0 + $0x10] sm:$0xff]
    %v32 = vld [vmem:[%s0 + $0x18] sm:$0xff]
    %v33 = vld [vmem:[%s0 + $0x20] sm:$0xff]
    %v34 = vld [vmem:[%s0 + $0x28] sm:$0xff]
    %v35 = vld [vmem:[%s0 + $0x30] sm:$0xff]
    %v36 = vld [vmem:[%s0 + $0x38] sm:$0xff]
    %v37 = vld [vmem:[%s0 + $0x40] sm:$0xff]
    %v38 = vld [vmem:[%s0 + $0x48] sm:$0xff]
    %v39 = vld [vmem:[%s0 + $0x50] sm:$0xff]
    %v40 = vld [vmem:[%s0 + $0x58] sm:$0xff]
    %v41 = vld [vmem:[%s0 + $0x60] sm:$0xff]
    %v42 = vld [vmem:[%s0 + $0x68] sm:$0xff]
    %v43 = vld [vmem:[%s0 + $0x70] sm:$0xff]
    %v44 = vld [vmem:[%s0 + $0x78] sm:$0xff]
    %v45 = vpack.c.bf16 %v30, %v29
    %v46 = vpack.c.bf16 %v32, %v31
    %v47 = vpack.c.bf16 %v34, %v33
    %v48 = vpack.c.bf16 %v36, %v35
    %v49 = vpack.c.bf16 %v38, %v37
    %v50 = vpack.c.bf16 %v40, %v39
    %v51 = vpack.c.bf16 %v42, %v41
    %v52 = vpack.c.bf16 %v44, %v43
    %v53 = vld [vmem:[%s1] sm:$0xf]
    %v54 = vld [vmem:[%s1 + $0x4] sm:$0xf]
    %v55 = vld [vmem:[%s1 + $0x8] sm:$0xf]
    %v56 = vld [vmem:[%s1 + $0xc] sm:$0xf]
    %v57 = vld [vmem:[%s2] sm:$0x1]
    %v59 = vlaneseq
    %v60 = vshrl.u32 %v59, 7
    %v61 = vsub.s32 0, %v60
    %v62 = vrot.slane %v57, %v61
    %v68 = vunpack.c.l.b16 %v53
    %v69 = vunpack.c.l.b16 %v54
    %v70 = vunpack.c.l.b16 %v55
    %v71 = vunpack.c.l.b16 %v56
    %v72 = vpack.c.b16 %v69, %v68
    %v73 = vpack.c.b16 %v71, %v70
    %vm76 = vcmask 261120
    %v78 = vsel %vm76, %v45, 0
    %v81 = vsel %vm76, %v46, 0
    %v84 = vsel %vm76, %v47, 0
    %v87 = vsel %vm76, %v48, 0
    %v90 = vsel %vm76, %v49, 0
    %v93 = vsel %vm76, %v50, 0
    %v96 = vsel %vm76, %v51, 0
    %v99 = vsel %vm76, %v52, 0
    %101 = vmatprep.subr.bf16.mxu0 0
    %102 = vmatpush1.bf16.msra.mxu0 %v72
    %103 = vmatprep.subr.bf16.mxu0 0
    %104 = vmatpush1.bf16.msra.mxu0 %v73
    %105 = vmatprep.subr.bf16.mxu0 0
    %106 = vmatpush1.bf16.msra.mxu0 0
    %107 = vmatprep.subr.bf16.mxu0 0
    %108 = vmatpush1.bf16.msra.mxu0 0
    %109 = vmatprep.subr.bf16.mxu0 0
    %110 = vmatpush1.bf16.msra.mxu0 0
    %111 = vmatprep.subr.bf16.mxu0 0
    %112 = vmatpush1.bf16.msra.mxu0 0
    %113 = vmatprep.subr.bf16.mxu0 0
    %114 = vmatpush1.bf16.msra.mxu0 0
    %115 = vmatprep.subr.bf16.mxu0 0
    %116 = vmatpush1.bf16.msra.mxu0 0
    %117 = vmatprep.subr.bf16.mxu0 0
    %118 = vmatpush1.bf16.msra.mxu0 0
    %119 = vmatprep.subr.bf16.mxu0 0
    %120 = vmatpush1.bf16.msra.mxu0 0
    %121 = vmatprep.subr.bf16.mxu0 0
    %122 = vmatpush1.bf16.msra.mxu0 0
    %123 = vmatprep.subr.bf16.mxu0 0
    %124 = vmatpush1.bf16.msra.mxu0 0
    %125 = vmatprep.subr.bf16.mxu0 0
    %126 = vmatpush1.bf16.msra.mxu0 0
    %127 = vmatprep.subr.bf16.mxu0 0
    %128 = vmatpush1.bf16.msra.mxu0 0
    %129 = vmatprep.subr.bf16.mxu0 0
    %130 = vmatpush1.bf16.msra.mxu0 0
    %131 = vmatprep.subr.bf16.mxu0 0
    %132 = vmatpush1.bf16.msra.mxu0 0
    %133 = vmatprep.mubr.bf16.mxu0 0
    %134 = vmatmul.mubr.bf16.gmra.mrb[0].mxu0 %v78
    %v135 = vpop.f32.mrb[0].mxu0
    %v136 = vadd.f32 %v62, %v135
    %v137 = vpop.f32.mrb[0].mxu0
    %v138 = vpop.f32.mrb[0].mxu0
    %v139 = vadd.f32 %v62, %v138
    %v140 = vpop.f32.mrb[0].mxu0
    %141 = vmatprep.mubr.bf16.mxu0 0
    %142 = vmatmul.mubr.bf16.gmra.mrb[0].mxu0 %v81
    %v143 = vpop.f32.mrb[0].mxu0
    %v144 = vadd.f32 %v62, %v143
    %v145 = vpop.f32.mrb[0].mxu0
    %v146 = vpop.f32.mrb[0].mxu0
    %v147 = vadd.f32 %v62, %v146
    %v148 = vpop.f32.mrb[0].mxu0
    %149 = vmatprep.mubr.bf16.mxu0 0
    %150 = vmatmul.mubr.bf16.gmra.mrb[0].mxu0 %v84
    %v151 = vpop.f32.mrb[0].mxu0
    %v152 = vadd.f32 %v62, %v151
    %v153 = vpop.f32.mrb[0].mxu0
    %v154 = vpop.f32.mrb[0].mxu0
    %v155 = vadd.f32 %v62, %v154
    %v156 = vpop.f32.mrb[0].mxu0
    %157 = vmatprep.mubr.bf16.mxu0 0
    %158 = vmatmul.mubr.bf16.gmra.mrb[0].mxu0 %v87
    %v159 = vpop.f32.mrb[0].mxu0
    %v160 = vadd.f32 %v62, %v159
    %v161 = vpop.f32.mrb[0].mxu0
    %v162 = vpop.f32.mrb[0].mxu0
    %v163 = vadd.f32 %v62, %v162
    %v164 = vpop.f32.mrb[0].mxu0
    %165 = vmatprep.mubr.bf16.mxu0 0
    %166 = vmatmul.mubr.bf16.gmra.mrb[0].mxu0 %v90
    %v167 = vpop.f32.mrb[0].mxu0
    %v168 = vadd.f32 %v62, %v167
    %v169 = vpop.f32.mrb[0].mxu0
    %v170 = vpop.f32.mrb[0].mxu0
    %v171 = vadd.f32 %v62, %v170
    %v172 = vpop.f32.mrb[0].mxu0
    %173 = vmatprep.mubr.bf16.mxu0 0
    %174 = vmatmul.mubr.bf16.gmra.mrb[0].mxu0 %v93
    %v175 = vpop.f32.mrb[0].mxu0
    %v176 = vadd.f32 %v62, %v175
    %v177 = vpop.f32.mrb[0].mxu0
    %v178 = vpop.f32.mrb[0].mxu0
    %v179 = vadd.f32 %v62, %v178
    %v180 = vpop.f32.mrb[0].mxu0
    %181 = vmatprep.mubr.bf16.mxu0 0
    %182 = vmatmul.mubr.bf16.gmra.mrb[0].mxu0 %v96
    %v183 = vpop.f32.mrb[0].mxu0
    %v184 = vadd.f32 %v62, %v183
    %v185 = vpop.f32.mrb[0].mxu0
    %v186 = vpop.f32.mrb[0].mxu0
    %v187 = vadd.f32 %v62, %v186
    %v188 = vpop.f32.mrb[0].mxu0
    %189 = vmatprep.mubr.bf16.mxu0 0
    %190 = vmatmul.mubr.bf16.gmra.mrb[0].mxu0 %v99
    %v191 = vpop.f32.mrb[0].mxu0
    %v192 = vadd.f32 %v62, %v191
    %v193 = vpop.f32.mrb[0].mxu0
    %v194 = vpop.f32.mrb[0].mxu0
    %v195 = vadd.f32 %v62, %v194
    %v196 = vpop.f32.mrb[0].mxu0
    %197 = vdwg.mxu0
    %vm198 = vcmp.gt.f32.partialorder %v136, 0.0
    %vm199 = vcmp.gt.f32.partialorder %v139, 0.0
    %vm200 = vcmp.gt.f32.partialorder %v144, 0.0
    %vm201 = vcmp.gt.f32.partialorder %v147, 0.0
    %vm202 = vcmp.gt.f32.partialorder %v152, 0.0
    %vm203 = vcmp.gt.f32.partialorder %v155, 0.0
    %vm204 = vcmp.gt.f32.partialorder %v160, 0.0
    %vm205 = vcmp.gt.f32.partialorder %v163, 0.0
    %vm206 = vcmp.gt.f32.partialorder %v168, 0.0
    %vm207 = vcmp.gt.f32.partialorder %v171, 0.0
    %vm208 = vcmp.gt.f32.partialorder %v176, 0.0
    %vm209 = vcmp.gt.f32.partialorder %v179, 0.0
    %vm210 = vcmp.gt.f32.partialorder %v184, 0.0
    %vm211 = vcmp.gt.f32.partialorder %v187, 0.0
    %vm212 = vcmp.gt.f32.partialorder %v192, 0.0
    %vm213 = vcmp.gt.f32.partialorder %v195, 0.0
    %v214 = vmul.f32 %v136, 0.01
    %v215 = vmul.f32 %v139, 0.01
    %v216 = vmul.f32 %v144, 0.01
    %v217 = vmul.f32 %v147, 0.01
    %v218 = vmul.f32 %v152, 0.01
    %v219 = vmul.f32 %v155, 0.01
    %v220 = vmul.f32 %v160, 0.01
    %v221 = vmul.f32 %v163, 0.01
    %v222 = vmul.f32 %v168, 0.01
    %v223 = vmul.f32 %v171, 0.01
    %v224 = vmul.f32 %v176, 0.01
    %v225 = vmul.f32 %v179, 0.01
    %v226 = vmul.f32 %v184, 0.01
    %v227 = vmul.f32 %v187, 0.01
    %v228 = vmul.f32 %v192, 0.01
    %v229 = vmul.f32 %v195, 0.01
    %v230 = vsel %vm198, %v136, %v214
    %v231 = vsel %vm199, %v139, %v215
    %v232 = vsel %vm200, %v144, %v216
    %v233 = vsel %vm201, %v147, %v217
    %v234 = vsel %vm202, %v152, %v218
    %v235 = vsel %vm203, %v155, %v219
    %v236 = vsel %vm204, %v160, %v220
    %v237 = vsel %vm205, %v163, %v221
    %v238 = vsel %vm206, %v168, %v222
    %v239 = vsel %vm207, %v171, %v223
    %v240 = vsel %vm208, %v176, %v224
    %v241 = vsel %vm209, %v179, %v225
    %v242 = vsel %vm210, %v184, %v226
    %v243 = vsel %vm211, %v187, %v227
    %v244 = vsel %vm212, %v192, %v228
    %v245 = vsel %vm213, %v195, %v229
    %v246 = vpack.c.bf16 %v231, %v230
    %v247 = vpack.c.bf16 %v233, %v232
    %v248 = vpack.c.bf16 %v235, %v234
    %v249 = vpack.c.bf16 %v237, %v236
    %v250 = vpack.c.bf16 %v239, %v238
    %v251 = vpack.c.bf16 %v241, %v240
    %v252 = vpack.c.bf16 %v243, %v242
    %v253 = vpack.c.bf16 %v245, %v244
    %v254 = vld [vmem:[%s3] sm:$0xf]
    %v255 = vld [vmem:[%s3 + $0x4] sm:$0xf]
    %v256 = vld [vmem:[%s3 + $0x8] sm:$0xf]
    %v257 = vld [vmem:[%s3 + $0xc] sm:$0xf]
    %v258 = vld [vmem:[%s3 + $0x10] sm:$0xf]
    %v259 = vld [vmem:[%s3 + $0x14] sm:$0xf]
    %v260 = vld [vmem:[%s3 + $0x18] sm:$0xf]
    %v261 = vld [vmem:[%s3 + $0x1c] sm:$0xf]
    %v262 = vld [vmem:[%s3 + $0x20] sm:$0xf]
    %v263 = vld [vmem:[%s3 + $0x24] sm:$0xf]
    %v264 = vld [vmem:[%s3 + $0x28] sm:$0xf]
    %v265 = vld [vmem:[%s3 + $0x2c] sm:$0xf]
    %v266 = vld [vmem:[%s3 + $0x30] sm:$0xf]
    %v267 = vld [vmem:[%s3 + $0x34] sm:$0xf]
    %v268 = vld [vmem:[%s3 + $0x38] sm:$0xf]
    %v269 = vld [vmem:[%s3 + $0x3c] sm:$0xf]
    %v270 = vld [vmem:[%s4] sm:$0x1]
    %v272 = vlaneseq
    %v273 = vshrl.u32 %v272, 7
    %v274 = vsub.s32 0, %v273
    %v275 = vrot.slane %v270, %v274
    %v293 = vunpack.c.l.b16 %v254
    %v294 = vunpack.c.l.b16 %v255
    %v295 = vunpack.c.l.b16 %v256
    %v296 = vunpack.c.l.b16 %v257
    %v297 = vunpack.c.l.b16 %v258
    %v298 = vunpack.c.l.b16 %v259
    %v299 = vunpack.c.l.b16 %v260
    %v300 = vunpack.c.l.b16 %v261
    %v301 = vunpack.c.l.b16 %v262
    %v302 = vunpack.c.l.b16 %v263
    %v303 = vunpack.c.l.b16 %v264
    %v304 = vunpack.c.l.b16 %v265
    %v305 = vunpack.c.l.b16 %v266
    %v306 = vunpack.c.l.b16 %v267
    %v307 = vunpack.c.l.b16 %v268
    %v308 = vunpack.c.l.b16 %v269
    %v309 = vpack.c.b16 %v294, %v293
    %v310 = vpack.c.b16 %v296, %v295
    %v311 = vpack.c.b16 %v298, %v297
    %v312 = vpack.c.b16 %v300, %v299
    %v313 = vpack.c.b16 %v302, %v301
    %v314 = vpack.c.b16 %v304, %v303
    %v315 = vpack.c.b16 %v306, %v305
    %v316 = vpack.c.b16 %v308, %v307
    %325 = vmatprep.subr.bf16.mxu0 0
    %326 = vmatpush1.bf16.msra.mxu0 %v309
    %327 = vmatprep.subr.bf16.mxu0 0
    %328 = vmatpush1.bf16.msra.mxu0 %v310
    %329 = vmatprep.subr.bf16.mxu0 0
    %330 = vmatpush1.bf16.msra.mxu0 %v311
    %331 = vmatprep.subr.bf16.mxu0 0
    %332 = vmatpush1.bf16.msra.mxu0 %v312
    %333 = vmatprep.subr.bf16.mxu0 0
    %334 = vmatpush1.bf16.msra.mxu0 %v313
    %335 = vmatprep.subr.bf16.mxu0 0
    %336 = vmatpush1.bf16.msra.mxu0 %v314
    %337 = vmatprep.subr.bf16.mxu0 0
    %338 = vmatpush1.bf16.msra.mxu0 %v315
    %339 = vmatprep.subr.bf16.mxu0 0
    %340 = vmatpush1.bf16.msra.mxu0 %v316
    %341 = vmatprep.subr.bf16.mxu0 0
    %342 = vmatpush1.bf16.msra.mxu0 0
    %343 = vmatprep.subr.bf16.mxu0 0
    %344 = vmatpush1.bf16.msra.mxu0 0
    %345 = vmatprep.subr.bf16.mxu0 0
    %346 = vmatpush1.bf16.msra.mxu0 0
    %347 = vmatprep.subr.bf16.mxu0 0
    %348 = vmatpush1.bf16.msra.mxu0 0
    %349 = vmatprep.subr.bf16.mxu0 0
    %350 = vmatpush1.bf16.msra.mxu0 0
    %351 = vmatprep.subr.bf16.mxu0 0
    %352 = vmatpush1.bf16.msra.mxu0 0
    %353 = vmatprep.subr.bf16.mxu0 0
    %354 = vmatpush1.bf16.msra.mxu0 0
    %355 = vmatprep.subr.bf16.mxu0 0
    %356 = vmatpush1.bf16.msra.mxu0 0
    %357 = vmatprep.mubr.bf16.mxu0 0
    %358 = vmatmul.mubr.bf16.gmra.mrb[0].mxu0 %v246
    %v359 = vpop.f32.mrb[0].mxu0
    %v360 = vadd.f32 %v275, %v359
    %v361 = vpop.f32.mrb[0].mxu0
    %v362 = vpop.f32.mrb[0].mxu0
    %v363 = vadd.f32 %v275, %v362
    %v364 = vpop.f32.mrb[0].mxu0
    %365 = vmatprep.mubr.bf16.mxu0 0
    %366 = vmatmul.mubr.bf16.gmra.mrb[0].mxu0 %v247
    %v367 = vpop.f32.mrb[0].mxu0
    %v368 = vadd.f32 %v275, %v367
    %v369 = vpop.f32.mrb[0].mxu0
    %v370 = vpop.f32.mrb[0].mxu0
    %v371 = vadd.f32 %v275, %v370
    %v372 = vpop.f32.mrb[0].mxu0
    %373 = vmatprep.mubr.bf16.mxu0 0
    %374 = vmatmul.mubr.bf16.gmra.mrb[0].mxu0 %v248
    %v375 = vpop.f32.mrb[0].mxu0
    %v376 = vadd.f32 %v275, %v375
    %v377 = vpop.f32.mrb[0].mxu0
    %v378 = vpop.f32.mrb[0].mxu0
    %v379 = vadd.f32 %v275, %v378
    %v380 = vpop.f32.mrb[0].mxu0
    %381 = vmatprep.mubr.bf16.mxu0 0
    %382 = vmatmul.mubr.bf16.gmra.mrb[0].mxu0 %v249
    %v383 = vpop.f32.mrb[0].mxu0
    %v384 = vadd.f32 %v275, %v383
    %v385 = vpop.f32.mrb[0].mxu0
    %v386 = vpop.f32.mrb[0].mxu0
    %v387 = vadd.f32 %v275, %v386
    %v388 = vpop.f32.mrb[0].mxu0
    %389 = vmatprep.mubr.bf16.mxu0 0
    %390 = vmatmul.mubr.bf16.gmra.mrb[0].mxu0 %v250
    %v391 = vpop.f32.mrb[0].mxu0
    %v392 = vadd.f32 %v275, %v391
    %v393 = vpop.f32.mrb[0].mxu0
    %v394 = vpop.f32.mrb[0].mxu0
    %v395 = vadd.f32 %v275, %v394
    %v396 = vpop.f32.mrb[0].mxu0
    %397 = vmatprep.mubr.bf16.mxu0 0
    %398 = vmatmul.mubr.bf16.gmra.mrb[0].mxu0 %v251
    %v399 = vpop.f32.mrb[0].mxu0
    %v400 = vadd.f32 %v275, %v399
    %v401 = vpop.f32.mrb[0].mxu0
    %v402 = vpop.f32.mrb[0].mxu0
    %v403 = vadd.f32 %v275, %v402
    %v404 = vpop.f32.mrb[0].mxu0
    %405 = vmatprep.mubr.bf16.mxu0 0
    %406 = vmatmul.mubr.bf16.gmra.mrb[0].mxu0 %v252
    %v407 = vpop.f32.mrb[0].mxu0
    %v408 = vadd.f32 %v275, %v407
    %v409 = vpop.f32.mrb[0].mxu0
    %v410 = vpop.f32.mrb[0].mxu0
    %v411 = vadd.f32 %v275, %v410
    %v412 = vpop.f32.mrb[0].mxu0
    %413 = vmatprep.mubr.bf16.mxu0 0
    %414 = vmatmul.mubr.bf16.gmra.mrb[0].mxu0 %v253
    %v415 = vpop.f32.mrb[0].mxu0
    %v416 = vadd.f32 %v275, %v415
    %v417 = vpop.f32.mrb[0].mxu0
    %v418 = vpop.f32.mrb[0].mxu0
    %v419 = vadd.f32 %v275, %v418
    %v420 = vpop.f32.mrb[0].mxu0
    %421 = vdwg.mxu0
    %vm422 = vcmp.gt.f32.partialorder %v360, 0.0
    %vm423 = vcmp.gt.f32.partialorder %v363, 0.0
    %vm424 = vcmp.gt.f32.partialorder %v368, 0.0
    %vm425 = vcmp.gt.f32.partialorder %v371, 0.0
    %vm426 = vcmp.gt.f32.partialorder %v376, 0.0
    %vm427 = vcmp.gt.f32.partialorder %v379, 0.0
    %vm428 = vcmp.gt.f32.partialorder %v384, 0.0
    %vm429 = vcmp.gt.f32.partialorder %v387, 0.0
    %vm430 = vcmp.gt.f32.partialorder %v392, 0.0
    %vm431 = vcmp.gt.f32.partialorder %v395, 0.0
    %vm432 = vcmp.gt.f32.partialorder %v400, 0.0
    %vm433 = vcmp.gt.f32.partialorder %v403, 0.0
    %vm434 = vcmp.gt.f32.partialorder %v408, 0.0
    %vm435 = vcmp.gt.f32.partialorder %v411, 0.0
    %vm436 = vcmp.gt.f32.partialorder %v416, 0.0
    %vm437 = vcmp.gt.f32.partialorder %v419, 0.0
    %v438 = vmul.f32 %v360, 0.01
    %v439 = vmul.f32 %v363, 0.01
    %v440 = vmul.f32 %v368, 0.01
    %v441 = vmul.f32 %v371, 0.01
    %v442 = vmul.f32 %v376, 0.01
    %v443 = vmul.f32 %v379, 0.01
    %v444 = vmul.f32 %v384, 0.01
    %v445 = vmul.f32 %v387, 0.01
    %v446 = vmul.f32 %v392, 0.01
    %v447 = vmul.f32 %v395, 0.01
    %v448 = vmul.f32 %v400, 0.01
    %v449 = vmul.f32 %v403, 0.01
    %v450 = vmul.f32 %v408, 0.01
    %v451 = vmul.f32 %v411, 0.01
    %v452 = vmul.f32 %v416, 0.01
    %v453 = vmul.f32 %v419, 0.01
    %v454 = vsel %vm422, %v360, %v438
    %v455 = vsel %vm423, %v363, %v439
    %v456 = vsel %vm424, %v368, %v440
    %v457 = vsel %vm425, %v371, %v441
    %v458 = vsel %vm426, %v376, %v442
    %v459 = vsel %vm427, %v379, %v443
    %v460 = vsel %vm428, %v384, %v444
    %v461 = vsel %vm429, %v387, %v445
    %v462 = vsel %vm430, %v392, %v446
    %v463 = vsel %vm431, %v395, %v447
    %v464 = vsel %vm432, %v400, %v448
    %v465 = vsel %vm433, %v403, %v449
    %v466 = vsel %vm434, %v408, %v450
    %v467 = vsel %vm435, %v411, %v451
    %v468 = vsel %vm436, %v416, %v452
    %v469 = vsel %vm437, %v419, %v453
    %v470 = vld [vmem:[%s5] sm:$0x1]
    %v472 = vlaneseq
    %v473 = vshrl.u32 %v472, 7
    %v474 = vsub.s32 0, %v473
    %v475 = vrot.slane %v470, %v474
    %v477 = vmul.f32 %v454, %v475
    %v478 = vmul.f32 %v455, %v475
    %v479 = vmul.f32 %v456, %v475
    %v480 = vmul.f32 %v457, %v475
    %v481 = vmul.f32 %v458, %v475
    %v482 = vmul.f32 %v459, %v475
    %v483 = vmul.f32 %v460, %v475
    %v484 = vmul.f32 %v461, %v475
    %v485 = vmul.f32 %v462, %v475
    %v486 = vmul.f32 %v463, %v475
    %v487 = vmul.f32 %v464, %v475
    %v488 = vmul.f32 %v465, %v475
    %v489 = vmul.f32 %v466, %v475
    %v490 = vmul.f32 %v467, %v475
    %v491 = vmul.f32 %v468, %v475
    %v492 = vmul.f32 %v469, %v475
    %493 = vadd.xlane.f32.xlu0 %v477
    %v494 = vpop.xlane.xlu0 %493
    %495 = vadd.xlane.f32.xlu0 %v478
    %v496 = vpop.xlane.xlu0 %495
    %497 = vadd.xlane.f32.xlu0 %v479
    %v498 = vpop.xlane.xlu0 %497
    %499 = vadd.xlane.f32.xlu0 %v480
    %v500 = vpop.xlane.xlu0 %499
    %501 = vadd.xlane.f32.xlu0 %v481
    %v502 = vpop.xlane.xlu0 %501
    %503 = vadd.xlane.f32.xlu0 %v482
    %v504 = vpop.xlane.xlu0 %503
    %505 = vadd.xlane.f32.xlu0 %v483
    %v506 = vpop.xlane.xlu0 %505
    %507 = vadd.xlane.f32.xlu0 %v484
    %v508 = vpop.xlane.xlu0 %507
    %509 = vadd.xlane.f32.xlu0 %v485
    %v510 = vpop.xlane.xlu0 %509
    %511 = vadd.xlane.f32.xlu0 %v486
    %v512 = vpop.xlane.xlu0 %511
    %513 = vadd.xlane.f32.xlu0 %v487
    %v514 = vpop.xlane.xlu0 %513
    %515 = vadd.xlane.f32.xlu0 %v488
    %v516 = vpop.xlane.xlu0 %515
    %517 = vadd.xlane.f32.xlu0 %v489
    %v518 = vpop.xlane.xlu0 %517
    %519 = vadd.xlane.f32.xlu0 %v490
    %v520 = vpop.xlane.xlu0 %519
    %521 = vadd.xlane.f32.xlu0 %v491
    %v522 = vpop.xlane.xlu0 %521
    %523 = vadd.xlane.f32.xlu0 %v492
    %v524 = vpop.xlane.xlu0 %523
    %s525 = sld [smem:[#allocation2]]
    %v526 = vstv %s525
    %v527 = vadd.f32 %v494, %v526
    %v528 = vadd.f32 %v496, %v526
    %v529 = vadd.f32 %v498, %v526
    %v530 = vadd.f32 %v500, %v526
    %v531 = vadd.f32 %v502, %v526
    %v532 = vadd.f32 %v504, %v526
    %v533 = vadd.f32 %v506, %v526
    %v534 = vadd.f32 %v508, %v526
    %v535 = vadd.f32 %v510, %v526
    %v536 = vadd.f32 %v512, %v526
    %v537 = vadd.f32 %v514, %v526
    %v538 = vadd.f32 %v516, %v526
    %v539 = vadd.f32 %v518, %v526
    %v540 = vadd.f32 %v520, %v526
    %v541 = vadd.f32 %v522, %v526
    %v542 = vadd.f32 %v524, %v526
    %v559 = vlaneseq
    %v560 = vand.u32 %v559, 127
    %v561 = vlaneseq
    %v562 = vshrl.u32 %v561, 7
    %v563 = vsub.s32 %v560, %v562
    %v564 = vrot.slane %v527, %v563
    %v565 = vadd.s32 %v560, 4294967288
    %v566 = vlaneseq
    %v567 = vshrl.u32 %v566, 7
    %v568 = vsub.s32 %v565, %v567
    %v569 = vrot.slane %v528, %v568
    %vm570 = vcmask 130112
    %v571 = vsel %vm570, %v569, %v564
    %v572 = vadd.s32 %v560, 4294967280
    %v573 = vlaneseq
    %v574 = vshrl.u32 %v573, 7
    %v575 = vsub.s32 %v572, %v574
    %v576 = vrot.slane %v529, %v575
    %vm577 = vcmask 195712
    %v578 = vsel %vm577, %v576, %v571
    %v579 = vadd.s32 %v560, 4294967272
    %v580 = vlaneseq
    %v581 = vshrl.u32 %v580, 7
    %v582 = vsub.s32 %v579, %v581
    %v583 = vrot.slane %v530, %v582
    %vm584 = vcmask 261312
    %v585 = vsel %vm584, %v583, %v578
    %v586 = vadd.s32 %v560, 4294967264
    %v587 = vlaneseq
    %v588 = vshrl.u32 %v587, 7
    %v589 = vsub.s32 %v586, %v588
    %v590 = vrot.slane %v531, %v589
    %vm591 = vcmask 326912
    %v592 = vsel %vm591, %v590, %v585
    %v593 = vadd.s32 %v560, 4294967256
    %v594 = vlaneseq
    %v595 = vshrl.u32 %v594, 7
    %v596 = vsub.s32 %v593, %v595
    %v597 = vrot.slane %v532, %v596
    %vm598 = vcmask 392512
    %v599 = vsel %vm598, %v597, %v592
    %v600 = vadd.s32 %v560, 4294967248
    %v601 = vlaneseq
    %v602 = vshrl.u32 %v601, 7
    %v603 = vsub.s32 %v600, %v602
    %v604 = vrot.slane %v533, %v603
    %vm605 = vcmask 458112
    %v606 = vsel %vm605, %v604, %v599
    %v607 = vadd.s32 %v560, 4294967240
    %v608 = vlaneseq
    %v609 = vshrl.u32 %v608, 7
    %v610 = vsub.s32 %v607, %v609
    %v611 = vrot.slane %v534, %v610
    %vm612 = vcmask 523712
    %v613 = vsel %vm612, %v611, %v606
    %v614 = vadd.s32 %v560, 4294967232
    %v615 = vlaneseq
    %v616 = vshrl.u32 %v615, 7
    %v617 = vsub.s32 %v614, %v616
    %v618 = vrot.slane %v535, %v617
    %vm619 = vcmask 589312
    %v620 = vsel %vm619, %v618, %v613
    %v621 = vadd.s32 %v560, 4294967224
    %v622 = vlaneseq
    %v623 = vshrl.u32 %v622, 7
    %v624 = vsub.s32 %v621, %v623
    %v625 = vrot.slane %v536, %v624
    %vm626 = vcmask 654912
    %v627 = vsel %vm626, %v625, %v620
    %v628 = vadd.s32 %v560, 4294967216
    %v629 = vlaneseq
    %v630 = vshrl.u32 %v629, 7
    %v631 = vsub.s32 %v628, %v630
    %v632 = vrot.slane %v537, %v631
    %vm633 = vcmask 720512
    %v634 = vsel %vm633, %v632, %v627
    %v635 = vadd.s32 %v560, 4294967208
    %v636 = vlaneseq
    %v637 = vshrl.u32 %v636, 7
    %v638 = vsub.s32 %v635, %v637
    %v639 = vrot.slane %v538, %v638
    %vm640 = vcmask 786112
    %v641 = vsel %vm640, %v639, %v634
    %v642 = vadd.s32 %v560, 4294967200
    %v643 = vlaneseq
    %v644 = vshrl.u32 %v643, 7
    %v645 = vsub.s32 %v642, %v644
    %v646 = vrot.slane %v539, %v645
    %vm647 = vcmask 851712
    %v648 = vsel %vm647, %v646, %v641
    %v649 = vadd.s32 %v560, 4294967192
    %v650 = vlaneseq
    %v651 = vshrl.u32 %v650, 7
    %v652 = vsub.s32 %v649, %v651
    %v653 = vrot.slane %v540, %v652
    %vm654 = vcmask 917312
    %v655 = vsel %vm654, %v653, %v648
    %v656 = vadd.s32 %v560, 4294967184
    %v657 = vlaneseq
    %v658 = vshrl.u32 %v657, 7
    %v659 = vsub.s32 %v656, %v658
    %v660 = vrot.slane %v541, %v659
    %vm661 = vcmask 982912
    %v662 = vsel %vm661, %v660, %v655
    %v663 = vadd.s32 %v560, 4294967176
    %v664 = vlaneseq
    %v665 = vshrl.u32 %v664, 7
    %v666 = vsub.s32 %v663, %v665
    %v667 = vrot.slane %v542, %v666
    %vm668 = vcmask 1048512
    %v669 = vsel %vm668, %v667, %v662
    %671 = vst [vmem:[#allocation3] sm:$0x1] %v669
    // Predicated region
    $region30: #{tpu_custom_call.1} parent=1 // pred_check
      _
    $region31: #{tpu_custom_call.1} parent=1 // pred_check_branch
      %673 = sbr.rel (0) target = $region33
    $region32: #{tpu_custom_call.1} parent=1 // pred_region
      %s675 = ssub.s32 16, 16
      %676 = vsyncadd [#allocation4], %s675
      %s678 = sshll.u32 [#allocation3], 4
      %s679 = int_to_ptr.vmem [resolvable:$true] %s678
      %681 = dma.vmem_to_hbm [thread:$0]  %s679, 16, %s7, [#allocation4]
    $region33: #{tpu_custom_call.1} parent=1 // pred_fallthru
      _
    // Predicated region
    $region34: #{tpu_custom_call.1} parent=1 // pred_check
      _
    $region35: #{tpu_custom_call.1} parent=1 // pred_check_branch
      %683 = sbr.rel (0) target = $region37
    $region36: #{tpu_custom_call.1} parent=1 // pred_region
      %684 = dma.done [#allocation4], 16
    $region37: #{tpu_custom_call.1} parent=1 // pred_fallthru
      _
    %685 = vsyncpa [#allocation4], 1

</llo_original>
